<compile_context>
chip_gen: v7x
topology: tpu7x:2x2x1
jax: 0.10.0
libtpu: 0.0.40
codegen_flags: <defaults>
</compile_context>

<pallas_src>
import numpy as np
import jax
import jax.numpy as jnp
from jax.experimental import pallas as pl
from jax.experimental.pallas import tpu as pltpu


# ----------------------------------------------------------------------------
# Production path: trace-time tuple concatenation (exact PyTorch semantics).
# ----------------------------------------------------------------------------
def tuple_add(x142: tuple, rhs: tuple = (768,)) -> tuple:
    """Replicates M.forward: operator.add(x142, (768,)) — static shape metadata."""
    return tuple(x142) + tuple(rhs)


# ----------------------------------------------------------------------------
# Recommended device-array path (if one is ever needed): let XLA constant-fold
# the three trace-time constants into a literal.  No Pallas launch involved.
# ----------------------------------------------------------------------------
def tuple_add_as_constant_array(x142: tuple, rhs: tuple = (768,)) -> jax.Array:
    vals = tuple(x142) + tuple(rhs)

    @jax.jit
    def _make():
        return jnp.asarray(vals, dtype=jnp.int32)  # folded to an XLA literal

    return _make()


# ----------------------------------------------------------------------------
# TEST-ONLY Pallas path: minimal SMEM passthrough of the pre-concatenated
# int32[3].  Kept solely to exercise pallas_call on TPU for this module.
# ----------------------------------------------------------------------------
def _passthrough_kernel(x_ref, o_ref):
    # SMEM supports scalar loads/stores only, so copy per element (3 sld/sst
    # in the otherwise-idle scalar slot).  o_ref is aliased to x_ref, so this
    # is pure launch overhead by design — there is nothing to pipeline.
    o_ref[0] = x_ref[0]
    o_ref[1] = x_ref[1]
    o_ref[2] = x_ref[2]


def tuple_add_on_device_testonly(x142: tuple, rhs: tuple = (768,)) -> jax.Array:
    """TEST-ONLY: device-resident int32[3] of the concatenated tuple via Pallas."""
    # Concatenate on host (static metadata), ship ONE small SMEM operand.
    packed = jnp.asarray(tuple(x142) + tuple(rhs), dtype=jnp.int32)
    out = pl.pallas_call(
        _passthrough_kernel,
        out_shape=jax.ShapeDtypeStruct((packed.shape[0],), jnp.int32),
        in_specs=[pl.BlockSpec(memory_space=pltpu.MemorySpace.SMEM)],
        out_specs=pl.BlockSpec(memory_space=pltpu.MemorySpace.SMEM),
        input_output_aliases={0: 0},  # reuse the input buffer for the output
    )(packed)
    return out


if __name__ == "__main__":
    _ = jax.random.PRNGKey(0)  # inputs are integer tuple constants; no RNG needed
    x142 = (1, 384)
    expected = (1, 384, 768)

    # 1) Production path — exact module semantics, zero device work.
    static_result = tuple_add(x142, (768,))
    assert static_result == expected, f"static mismatch: {static_result}"

    # 2) TEST-ONLY: run the minimal Pallas kernel once to verify it compiles
    #    and runs cleanly on TPU.  The block/readback below is test-only; a
    #    production consumer would leave the array on device (or never create
    #    it at all, per the review).
    dev_result = tuple_add_on_device_testonly(x142, (768,))
    dev_result = jax.block_until_ready(dev_result)
    got = tuple(np.asarray(jax.device_get(dev_result)).tolist())  # single readback
    assert got == expected, f"device mismatch: {got} != {expected}"

    print("KERNEL_OK")
</pallas_src>

<mosaic_0001>
module attributes {stable_mosaic.version = 11 : i64} {
  func.func @_passthrough_kernel(%arg0: memref<3xi32, #tpu.memory_space<smem>>, %arg1: memref<3xi32, #tpu.memory_space<smem>>) attributes {dimension_semantics = [], scalar_prefetch = 0 : i64, scratch_operands = 0 : i64, tpu.core_type = #tpu.core_type<tc>} {
    %c0 = arith.constant 0 : index
    %0 = memref.load %arg0[%c0] : memref<3xi32, #tpu.memory_space<smem>>
    %c0_0 = arith.constant 0 : index
    %1 = memref.load %arg1[%c0_0] : memref<3xi32, #tpu.memory_space<smem>>
    memref.store %0, %arg1[%c0_0] : memref<3xi32, #tpu.memory_space<smem>>
    %c1 = arith.constant 1 : index
    %2 = memref.load %arg0[%c1] : memref<3xi32, #tpu.memory_space<smem>>
    %c1_1 = arith.constant 1 : index
    %3 = memref.load %arg1[%c1_1] : memref<3xi32, #tpu.memory_space<smem>>
    memref.store %2, %arg1[%c1_1] : memref<3xi32, #tpu.memory_space<smem>>
    %c2 = arith.constant 2 : index
    %4 = memref.load %arg0[%c2] : memref<3xi32, #tpu.memory_space<smem>>
    %c2_2 = arith.constant 2 : index
    %5 = memref.load %arg1[%c2_2] : memref<3xi32, #tpu.memory_space<smem>>
    memref.store %4, %arg1[%c2_2] : memref<3xi32, #tpu.memory_space<smem>>
    return
  }
}

</mosaic_0001>

<llo_original>
// kernel: tpu_custom_call.1
$region0: #{tpu_custom_call.1}
  #allocation0 [shape = 'u32[]', space=smem, size = 0x4, offset = 0x4, fixed_abs, tag = 'smem constant byte address 0x4 - core index']
  #allocation1 [shape = 'u32[144,128]{1,0:T(1,128)}', space=vmem, size = 0x12000, scoped, tag = 'internal scratch']
  %s0 = inlined_call_operand.hbm [shape: s32[3], index: 0, kind: input, shape index: {}, may-alias: {0,1}]
  %s1 = inlined_call_operand.hbm [shape: s32[3], index: 1, kind: output, shape index: {}, may-alias: {0,1}]
  %s2 = sld [smem:[#allocation0]]
  $region18: #{tpu_custom_call.1} parent=0
    _
  %s4 = ssub.s32 1, %s2
  %s5 = scalar_select 0, %s4, %s2
  $region1: #{tpu_custom_call.1} parent=0
    #allocation2 [shape = 'u8[512]{0}', space=smem, size = 0x200, scoped, tag = 'input window, operand 0, single buffered']
    #allocation3 [shape = 's32[1]{0}', space=sflag, size = 0x4, scoped, tag = 'scoped memory for tpu_custom_call.1']
    #allocation4 [shape = 's32[1]{0}', space=sflag, size = 0x4, scoped, tag = 'scoped memory for tpu_custom_call.1']
    #allocation5 [shape = 'u8[512]{0}', space=smem, size = 0x200, scoped, tag = 'output window, operand 0, single buffered']
    %6 = vsyncpa [#allocation3], 0
    %7 = vsyncpa [#allocation4], 0
    // Predicated region
    $region2: #{tpu_custom_call.1} parent=1 // pred_check
      _
    $region3: #{tpu_custom_call.1} parent=1 // pred_check_branch
      %9 = sbr.rel (0) target = $region5
    $region4: #{tpu_custom_call.1} parent=1 // pred_region
      %s11 = ssub.s32 16, 16
      %12 = vsyncadd [#allocation3], %s11
      %15 = dma.hbm_to_smem %s0, 16, [#allocation2], [#allocation3]
    $region5: #{tpu_custom_call.1} parent=1 // pred_fallthru
      _
    // Predicated region
    $region6: #{tpu_custom_call.1} parent=1 // pred_check
      _
    $region7: #{tpu_custom_call.1} parent=1 // pred_check_branch
      %17 = sbr.rel (0) target = $region9
    $region8: #{tpu_custom_call.1} parent=1 // pred_region
      %18 = dma.done [#allocation3], 16
    $region9: #{tpu_custom_call.1} parent=1 // pred_fallthru
      _
    %19 = sfence
    %s20 = sld [smem:[#allocation2]]
    %s21 = scalar_lea.smem [#allocation5], 0
    %22 = sst [smem:[%s21]] %s20
    %s23 = sld [smem:[#allocation2 + $0x1]]
    %s24 = scalar_lea.smem [#allocation5], 1
    %25 = sst [smem:[%s24]] %s23
    %s26 = sld [smem:[#allocation2 + $0x2]]
    %s27 = scalar_lea.smem [#allocation5], 2
    %28 = sst [smem:[%s27]] %s26
    // Predicated region
    $region10: #{tpu_custom_call.1} parent=1 // pred_check
      _
    $region11: #{tpu_custom_call.1} parent=1 // pred_check_branch
      %30 = sbr.rel (0) target = $region13
    $region12: #{tpu_custom_call.1} parent=1 // pred_region
      %s32 = ssub.s32 16, 16
      %33 = vsyncadd [#allocation4], %s32
      %36 = dma.smem_to_hbm [#allocation5], 16, %s1, [#allocation4]
    $region13: #{tpu_custom_call.1} parent=1 // pred_fallthru
      _
    // Predicated region
    $region14: #{tpu_custom_call.1} parent=1 // pred_check
      _
    $region15: #{tpu_custom_call.1} parent=1 // pred_check_branch
      %38 = sbr.rel (0) target = $region17
    $region16: #{tpu_custom_call.1} parent=1 // pred_region
      %39 = dma.done [#allocation4], 16
    $region17: #{tpu_custom_call.1} parent=1 // pred_fallthru
      _
    %40 = sfence
    %41 = vsyncpa [#allocation3], 1
    %42 = vsyncpa [#allocation4], 1

</llo_original>
